<compile_context>
chip_gen: v7x
topology: tpu7x:2x2x1
jax: 0.10.0
libtpu: 0.0.40
codegen_flags: <defaults>
</compile_context>

<pallas_src>
import jax
import jax.numpy as jnp
from jax import lax
from jax.experimental import pallas as pl
from jax.experimental.pallas import tpu as pltpu


# ---------------------------------------------------------------------------
# Kernels
# ---------------------------------------------------------------------------
def _sto_linear_kernel_direct(x_ref, w_ref, nin_ref, nout_ref, o_ref):
    """f32-output path: accumulate straight into the resident output block.

    x_ref:    (tm, tk)  activation tile (any float dtype)
    w_ref:    (tn, tk)  weight tile, PyTorch (out, in) layout, ALREADY bf16
    nin_ref:  (tm, tk)  multiplicative input-noise tile (f32)
    nout_ref: (tm, tn)  multiplicative output-noise tile (f32)
    o_ref:    (tm, tn)  f32 output tile, resident across the k axis
    """
    k = pl.program_id(2)

    @pl.when(k == 0)
    def _init():
        o_ref[...] = jnp.zeros_like(o_ref)

    # Noise scaling in f32 on the VPU; only the MXU operand is cast (weight is
    # already in the MXU dtype, so there is no per-step weight cast).
    xn = (x_ref[...].astype(jnp.float32) * nin_ref[...]).astype(w_ref.dtype)
    o_ref[...] += lax.dot_general(
        xn, w_ref[...],
        dimension_numbers=(((1,), (1,)), ((), ())),   # contract over "in"
        preferred_element_type=jnp.float32)

    @pl.when(k == pl.num_programs(2) - 1)
    def _finalize():
        o_ref[...] = o_ref[...] * nout_ref[...]


def _sto_linear_kernel_scratch(x_ref, w_ref, nin_ref, nout_ref, o_ref, acc_ref):
    """Narrow-output path (bf16/fp8 out): f32 VMEM accumulator + final cast."""
    k = pl.program_id(2)

    @pl.when(k == 0)
    def _init():
        acc_ref[...] = jnp.zeros_like(acc_ref)

    xn = (x_ref[...].astype(jnp.float32) * nin_ref[...]).astype(w_ref.dtype)
    acc_ref[...] += lax.dot_general(
        xn, w_ref[...],
        dimension_numbers=(((1,), (1,)), ((), ())),
        preferred_element_type=jnp.float32)

    @pl.when(k == pl.num_programs(2) - 1)
    def _finalize():
        o_ref[...] = (acc_ref[...] * nout_ref[...]).astype(o_ref.dtype)


# ---------------------------------------------------------------------------
# Tile selection / VMEM sizing helpers
# ---------------------------------------------------------------------------
def _fit_tile(dim, preferred, alignments):
    """Largest divisor of `dim` that is <= `preferred` and a multiple of one of
    `alignments` (tried in order).  Falls back to the full dim (always legal)."""
    preferred = min(preferred, dim)
    for align in alignments:
        t = (preferred // align) * align
        while t >= align:
            if dim % t == 0:
                return t
            t -= align
    return dim


def _shrink_tile(dim, cur, alignments):
    """Next-smaller legal tile (or `cur` if it cannot shrink)."""
    if cur <= alignments[-1]:
        return cur
    new = _fit_tile(dim, max(cur // 2, alignments[-1]), alignments)
    return new if new < cur else cur


def _working_set_bytes(tm, tn, tk, x_bytes, w_bytes, out_bytes, needs_scratch):
    """Double-buffered VMEM working set for one grid step."""
    ws = 2 * (tm * tk * (x_bytes + 4)        # x + noise_in (f32)
              + tn * tk * w_bytes            # weight (bf16)
              + tm * tn * (4 + out_bytes))   # noise_out (f32) + output
    if needs_scratch:
        ws += tm * tn * 4                    # f32 accumulator (single buffer)
    return ws


def _vmem_capacity_bytes(default=64 * 1024 * 1024):
    """Physical VMEM per TensorCore; conservative 64 MiB (v7x) fallback."""
    try:
        return int(pltpu.get_tpu_info().vmem_capacity_bytes)
    except Exception:
        return default


# ---------------------------------------------------------------------------
# Wrapper
# ---------------------------------------------------------------------------
def sto_linear_forward(x, weight, noise_in, noise_out, *,
                       tm=512, tn=1024, tk=512,
                       mxu_dtype=jnp.bfloat16,
                       out_dtype=None,
                       vmem_budget_frac=0.45):
    """x: (B, in); weight: (out, in) [PyTorch nn.Linear layout — NOT transposed,
    ideally pre-cast to `mxu_dtype`]; noise_in: (B, in); noise_out: (B, out).
    Returns (B, out) in `out_dtype` (default: x.dtype)."""
    batch, in_features = x.shape
    out_features, in_w = weight.shape
    assert in_w == in_features, "weight must be (out_features, in_features)"
    assert noise_in.shape == (batch, in_features)
    assert noise_out.shape == (batch, out_features)

    out_dtype = x.dtype if out_dtype is None else out_dtype
    use_direct = jnp.dtype(out_dtype) == jnp.dtype(jnp.float32)

    # Cast the weight once (no-op if the caller already stores it in bf16);
    # the kernel then consumes it without any per-step VPU cast.
    w_mxu = weight if weight.dtype == jnp.dtype(mxu_dtype) else weight.astype(mxu_dtype)
    noise_in = noise_in.astype(jnp.float32)
    noise_out = noise_out.astype(jnp.float32)

    x_bytes = jnp.dtype(x.dtype).itemsize
    w_bytes = jnp.dtype(w_mxu.dtype).itemsize
    o_bytes = jnp.dtype(out_dtype).itemsize

    # --- tile selection: lane dims multiples of 128, tm multiple of 16 (bf16
    # sublane packing) falling back to 8; shrink until the double-buffered
    # working set fits the per-TensorCore VMEM budget (v7x: 64 MiB physical).
    tm_aligns = (16, 8) if w_bytes < 4 else (8,)
    ln_aligns = (128,)
    tm = _fit_tile(batch, tm, tm_aligns)
    tn = _fit_tile(out_features, tn, ln_aligns)
    tk = _fit_tile(in_features, tk, ln_aligns)

    vmem_cap = _vmem_capacity_bytes()
    budget = int(vmem_cap * vmem_budget_frac)
    for _ in range(32):
        if _working_set_bytes(tm, tn, tk, x_bytes, w_bytes, o_bytes,
                              not use_direct) <= budget:
            break
        # Shrink the reduction dim first (never M / output-N if avoidable).
        ntk = _shrink_tile(in_features, tk, ln_aligns)
        if ntk < tk:
            tk = ntk
            continue
        ntn = _shrink_tile(out_features, tn, ln_aligns)
        if ntn < tn:
            tn = ntn
            continue
        ntm = _shrink_tile(batch, tm, tm_aligns)
        if ntm < tm:
            tm = ntm
            continue
        break

    # v7x has 2 TensorCores sharded over the "parallel" grid axes: for
    # non-trivial problems make sure there are at least 2 parallel tiles.
    # (Tiny problems keep a single block — grid-step overhead would dominate.)
    if (batch * out_features * in_features >= (1 << 24)
            and (batch // tm) * (out_features // tn) < 2):
        if tn >= 256 and out_features % (tn // 2) == 0:
            tn //= 2
        elif tm >= 2 * tm_aligns[-1] and batch % (tm // 2) == 0:
            tm //= 2

    grid = (batch // tm, out_features // tn, in_features // tk)
    n_i, n_j, _ = grid

    ws = _working_set_bytes(tm, tn, tk, x_bytes, w_bytes, o_bytes, not use_direct)
    vmem_limit = max(16 * 1024 * 1024, min(2 * ws, int(0.9 * vmem_cap)))
    vmem_limit = max(vmem_limit, min(ws + (2 << 20), vmem_cap))

    # Realistic HBM traffic: x/noise_in are re-streamed once per j-sweep,
    # weight once per i-sweep; noise_out and the output move once per tile.
    cost = pl.CostEstimate(
        flops=int(2 * batch * in_features * out_features),
        transcendentals=0,
        bytes_accessed=int(
            batch * in_features * (x_bytes + 4) * n_j
            + out_features * in_features * w_bytes * n_i
            + batch * out_features * 4
            + batch * out_features * o_bytes),
    )

    kernel = _sto_linear_kernel_direct if use_direct else _sto_linear_kernel_scratch
    scratch_shapes = [] if use_direct else [pltpu.VMEM((tm, tn), jnp.float32)]

    return pl.pallas_call(
        kernel,
        out_shape=jax.ShapeDtypeStruct((batch, out_features), out_dtype),
        grid_spec=pltpu.PrefetchScalarGridSpec(
            num_scalar_prefetch=0,
            grid=grid,
            in_specs=[
                pl.BlockSpec((tm, tk), lambda i, j, k: (i, k)),   # x
                pl.BlockSpec((tn, tk), lambda i, j, k: (j, k)),   # weight (out,in), bf16
                pl.BlockSpec((tm, tk), lambda i, j, k: (i, k)),   # noise_in
                pl.BlockSpec((tm, tn), lambda i, j, k: (i, j)),   # noise_out
            ],
            out_specs=pl.BlockSpec((tm, tn), lambda i, j, k: (i, j)),
            scratch_shapes=scratch_shapes,
        ),
        compiler_params=pltpu.CompilerParams(
            # i/j parallel -> sharded across v7x's 2 TensorCores; k is the
            # reduction (resident-output / accumulator) axis -> "arbitrary".
            dimension_semantics=("parallel", "parallel", "arbitrary"),
            vmem_limit_bytes=int(vmem_limit),
        ),
        cost_estimate=cost,
    )(x, w_mxu, noise_in, noise_out)


# ---------------------------------------------------------------------------
# Stochastic-noise glue (pure JAX; XLA fuses gather + softplus + FMA)
# ---------------------------------------------------------------------------
def get_noise(post_mean, post_std, indices, epsilon, in_features, out_features):
    """noise = mean[indices] + softplus(std)[indices] * epsilon, returned
    pre-split into (noise_in, noise_out) (mode='inout', stochastic_mode=1) so
    no concatenated (B, in+out) buffer is re-sliced around the kernel."""
    latent = post_mean.shape[1]
    assert latent == in_features + out_features, "noise width must equal in+out"
    assert epsilon.shape[1] == latent
    std = jax.nn.softplus(post_std)
    mean_in, mean_out = post_mean[:, :in_features], post_mean[:, -out_features:]
    std_in, std_out = std[:, :in_features], std[:, -out_features:]
    eps_in, eps_out = epsilon[:, :in_features], epsilon[:, -out_features:]
    noise_in = mean_in[indices] + std_in[indices] * eps_in
    noise_out = mean_out[indices] + std_out[indices] * eps_out
    # TODO(synk): fuse this gather+softplus into the kernel (one-hot gather of
    # the tiny (K, in+out) tables against a per-tile index vector).  Deferred:
    # the gather has to be redone every k-step, adding ~2*128/tn extra MXU
    # passes (or a VPU select-chain that exceeds the MXU time at tn<=512);
    # the HBM saving is only the single (B, in+out) noise writeback.
    return noise_in, noise_out


# ---------------------------------------------------------------------------
# Demo / smoke test
# ---------------------------------------------------------------------------
if __name__ == "__main__":
    # Shapes consistent with StoLinear(in_features=256, out_features=256,
    # n_components=4, mode='inout', bias=False), batch=32.
    batch, in_features, out_features, n_components = 32, 256, 256, 4
    latent = in_features + out_features  # mode='inout' -> sum(weight.shape[:2])

    key = jax.random.PRNGKey(0)
    kw, km, ks, ke, kx = jax.random.split(key, 5)

    # Deterministic parameter init (shapes per the module's __init__):
    #   weight: (out, in) ~ U(-1/sqrt(in), 1/sqrt(in))   (nn.Linear-style)
    #   post_mean: (K, in+out) ~ N(0.9, 0.25); post_std: (K, in+out) ~ N(0.5, 0.25)
    bound = 1.0 / (in_features ** 0.5)
    weight = jax.random.uniform(
        kw, (out_features, in_features), jnp.float32, -bound, bound)
    post_mean = 0.9 + 0.25 * jax.random.normal(
        km, (n_components, latent), jnp.float32)
    post_std = 0.5 + 0.25 * jax.random.normal(
        ks, (n_components, latent), jnp.float32)

    # "Cast once at parameter level": the bf16 weight is created a single time
    # and reused for every forward call (no per-call / per-step cast).
    weight_bf16 = weight.astype(jnp.bfloat16)

    # Inputs.
    x = jax.random.normal(kx, (batch, in_features), jnp.float32)
    indices = jnp.arange(batch, dtype=jnp.int32) % n_components
    epsilon = jax.random.normal(ke, (batch, latent), jnp.float32)

    # Stochastic multiplicative noise (glue), then the fused tiled forward.
    noise_in, noise_out = get_noise(
        post_mean, post_std, indices, epsilon, in_features, out_features)

    # (a) Auto tiles: tiny shapes -> a single lane-dense block (grid (1,1,1)).
    out_auto = sto_linear_forward(x, weight_bf16, noise_in, noise_out)
    # (b) Forced small tiles: exercises the multi-step k reduction with the
    #     direct-into-output f32 accumulation path (grid (2,2,2)).
    out_tiled = sto_linear_forward(x, weight_bf16, noise_in, noise_out,
                                   tm=16, tn=128, tk=128)
    # (c) bf16 output: exercises the f32-scratch + final-cast path.
    out_bf16 = sto_linear_forward(x, weight_bf16, noise_in, noise_out,
                                  tm=16, tn=128, tk=128,
                                  out_dtype=jnp.bfloat16)
    out_auto, out_tiled, out_bf16 = jax.block_until_ready(
        (out_auto, out_tiled, out_bf16))
    assert out_auto.shape == (batch, out_features)
    assert out_tiled.shape == (batch, out_features)
    assert out_bf16.shape == (batch, out_features)

    # (1) Exact-ish check of the kernel math: same bf16 MXU operands, f32 acc.
    xn_bf16 = (x * noise_in).astype(jnp.bfloat16)
    ref_bf16 = lax.dot_general(
        xn_bf16, weight_bf16, (((1,), (1,)), ((), ())),
        preferred_element_type=jnp.float32) * noise_out
    assert jnp.allclose(out_auto, ref_bf16, atol=1e-3, rtol=1e-3)
    assert jnp.allclose(out_tiled, ref_bf16, atol=1e-3, rtol=1e-3)

    # (2) Module-semantics check against the pure-f32 reference (looser
    #     tolerance: MXU operands are bf16; accumulation stays f32).
    ref_f32 = ((x * noise_in) @ weight.T) * noise_out
    assert jnp.allclose(out_auto, ref_f32, atol=1e-1, rtol=5e-2)
    assert jnp.allclose(out_tiled, ref_f32, atol=1e-1, rtol=5e-2)

    # (3) Narrow-output (scratch) path matches the f32 path up to bf16 rounding.
    assert jnp.allclose(out_bf16.astype(jnp.float32), out_tiled,
                        atol=1e-2, rtol=1e-2)

    print("KERNEL_OK")
</pallas_src>

<mosaic_0001>
module attributes {stable_mosaic.version = 11 : i64} {
  func.func @_sto_linear_kernel_direct(%arg0: i32, %arg1: i32, %arg2: i32, %arg3: memref<32x256xf32, #tpu.memory_space<vmem>>, %arg4: memref<256x256xbf16, #tpu.memory_space<vmem>>, %arg5: memref<32x256xf32, #tpu.memory_space<vmem>>, %arg6: memref<32x256xf32, #tpu.memory_space<vmem>>, %arg7: memref<32x256xf32, #tpu.memory_space<vmem>>) attributes {dimension_semantics = [#tpu.dimension_semantics<parallel>, #tpu.dimension_semantics<parallel>, #tpu.dimension_semantics<arbitrary>], iteration_bounds = array<i64: 1, 1, 1>, scalar_prefetch = 0 : i64, scratch_operands = 0 : i64, tpu.core_type = #tpu.core_type<tc>, window_params = [{transform_indices = @transform_0, window_bounds = array<i64: 32, 256>}, {transform_indices = @transform_1, window_bounds = array<i64: 256, 256>}, {transform_indices = @transform_2, window_bounds = array<i64: 32, 256>}, {transform_indices = @transform_3, window_bounds = array<i64: 32, 256>}, {transform_indices = @transform_4, window_bounds = array<i64: 32, 256>}]} {
    %c0_i32 = arith.constant 0 : i32
    %0 = arith.cmpi eq, %arg2, %c0_i32 : i32
    %1 = arith.extui %0 : i1 to i32
    %c0_i32_0 = arith.constant 0 : i32
    %2 = arith.cmpi ne, %1, %c0_i32_0 : i32
    scf.if %2 {
      %cst_12 = arith.constant 0.000000e+00 : f32
      %15 = vector.broadcast %cst_12 : f32 to vector<32x256xf32>
      %c0_13 = arith.constant 0 : index
      %c0_14 = arith.constant 0 : index
      %16 = vector.load %arg7[%c0_13, %c0_14] : memref<32x256xf32, #tpu.memory_space<vmem>>, vector<32x256xf32>
      tpu.vector_store %arg7[%c0_13, %c0_14], %15 {strides = array<i32>} : memref<32x256xf32, #tpu.memory_space<vmem>>, vector<32x256xf32>,
    } else {
    }
    %c0 = arith.constant 0 : index
    %c0_1 = arith.constant 0 : index
    %3 = vector.load %arg3[%c0, %c0_1] : memref<32x256xf32, #tpu.memory_space<vmem>>, vector<32x256xf32>
    %c0_2 = arith.constant 0 : index
    %c0_3 = arith.constant 0 : index
    %4 = vector.load %arg5[%c0_2, %c0_3] : memref<32x256xf32, #tpu.memory_space<vmem>>, vector<32x256xf32>
    %5 = arith.mulf %3, %4 : vector<32x256xf32>
    %6 = arith.truncf %5 : vector<32x256xf32> to vector<32x256xbf16>
    %c0_4 = arith.constant 0 : index
    %c0_5 = arith.constant 0 : index
    %7 = vector.load %arg7[%c0_4, %c0_5] : memref<32x256xf32, #tpu.memory_space<vmem>>, vector<32x256xf32>
    %c0_6 = arith.constant 0 : index
    %c0_7 = arith.constant 0 : index
    %8 = vector.load %arg4[%c0_6, %c0_7] : memref<256x256xbf16, #tpu.memory_space<vmem>>, vector<256x256xbf16>
    %cst = arith.constant dense<0.000000e+00> : vector<32x256xf32>
    %9 = tpu.matmul %6, %8, %cst {dimension_numbers = #tpu.dot_dimension_numbers<[1], [1], [0], [0], [0, 0, 1, 0], [], []>} : vector<32x256xbf16>, vector<256x256xbf16>, vector<32x256xf32> -> vector<32x256xf32>
    %10 = arith.addf %7, %9 : vector<32x256xf32>
    %c0_8 = arith.constant 0 : index
    %c0_9 = arith.constant 0 : index
    %11 = vector.load %arg7[%c0_8, %c0_9] : memref<32x256xf32, #tpu.memory_space<vmem>>, vector<32x256xf32>
    tpu.vector_store %arg7[%c0_8, %c0_9], %10 {strides = array<i32>} : memref<32x256xf32, #tpu.memory_space<vmem>>, vector<32x256xf32>,
    %c0_i32_10 = arith.constant 0 : i32
    %12 = arith.cmpi eq, %arg2, %c0_i32_10 : i32
    %13 = arith.extui %12 : i1 to i32
    %c0_i32_11 = arith.constant 0 : i32
    %14 = arith.cmpi ne, %13, %c0_i32_11 : i32
    scf.if %14 {
      %c0_12 = arith.constant 0 : index
      %c0_13 = arith.constant 0 : index
      %15 = vector.load %arg7[%c0_12, %c0_13] : memref<32x256xf32, #tpu.memory_space<vmem>>, vector<32x256xf32>
      %c0_14 = arith.constant 0 : index
      %c0_15 = arith.constant 0 : index
      %16 = vector.load %arg6[%c0_14, %c0_15] : memref<32x256xf32, #tpu.memory_space<vmem>>, vector<32x256xf32>
      %17 = arith.mulf %15, %16 : vector<32x256xf32>
      %c0_16 = arith.constant 0 : index
      %c0_17 = arith.constant 0 : index
      %18 = vector.load %arg7[%c0_16, %c0_17] : memref<32x256xf32, #tpu.memory_space<vmem>>, vector<32x256xf32>
      tpu.vector_store %arg7[%c0_16, %c0_17], %17 {strides = array<i32>} : memref<32x256xf32, #tpu.memory_space<vmem>>, vector<32x256xf32>,
    } else {
    }
    return
  }
  func.func @transform_0(%arg0: i32, %arg1: i32, %arg2: i32) -> (i32, i32) {
    %c0_i32 = arith.constant 0 : i32
    return %arg0, %arg2 : i32, i32
  }
  func.func @transform_1(%arg0: i32, %arg1: i32, %arg2: i32) -> (i32, i32) {
    %c0_i32 = arith.constant 0 : i32
    return %arg1, %arg2 : i32, i32
  }
  func.func @transform_2(%arg0: i32, %arg1: i32, %arg2: i32) -> (i32, i32) {
    %c0_i32 = arith.constant 0 : i32
    return %arg0, %arg2 : i32, i32
  }
  func.func @transform_3(%arg0: i32, %arg1: i32, %arg2: i32) -> (i32, i32) {
    %c0_i32 = arith.constant 0 : i32
    return %arg0, %arg1 : i32, i32
  }
  func.func @transform_4(%arg0: i32, %arg1: i32, %arg2: i32) -> (i32, i32) {
    %c0_i32 = arith.constant 0 : i32
    return %arg0, %arg1 : i32, i32
  }
}

</mosaic_0001>

<llo_original>
// kernel: tpu_custom_call.1
$region0: #{tpu_custom_call.1}
  #allocation0 [shape = 'u32[]', space=smem, size = 0x4, offset = 0x4, fixed_abs, tag = 'smem constant byte address 0x4 - core index']
  #allocation1 [shape = 'u32[144,128]{1,0:T(1,128)}', space=vmem, size = 0x12000, scoped, tag = 'internal scratch']
  %s0 = inlined_call_operand.hbm [shape: f32[32,256], index: 0, kind: input, shape index: {}]
  %s1 = inlined_call_operand.hbm [shape: bf16[256,256], index: 1, kind: input, shape index: {}]
  %s2 = inlined_call_operand.hbm [shape: f32[32,256], index: 2, kind: input, shape index: {}]
  %s3 = inlined_call_operand.hbm [shape: f32[32,256], index: 3, kind: input, shape index: {}]
  %s4 = inlined_call_operand.hbm [shape: f32[32,256], index: 4, kind: output, shape index: {}]
  %s5 = sld [smem:[#allocation0]]
  $region50: #{tpu_custom_call.1} parent=0
    _
  %s7 = ssub.s32 1, %s5
  %s8 = scalar_select 0, %s7, %s5
  $region1: #{tpu_custom_call.1} parent=0
    #allocation2 [shape = 'u8[32768]{0}', space=vmem, size = 0x8000, scoped, tag = 'input window, operand 0, single buffered']
    #allocation3 [shape = 's32[1]{0}', space=sflag, size = 0x4, scoped, tag = 'scoped memory for tpu_custom_call.1']
    #allocation4 [shape = 's32[1]{0}', space=sflag, size = 0x4, scoped, tag = 'scoped memory for tpu_custom_call.1']
    #allocation5 [shape = 'u8[131072]{0}', space=vmem, size = 0x20000, scoped, tag = 'input window, operand 1, single buffered']
    #allocation6 [shape = 's32[1]{0}', space=sflag, size = 0x4, scoped, tag = 'scoped memory for tpu_custom_call.1']
    #allocation7 [shape = 'u8[32768]{0}', space=vmem, size = 0x8000, scoped, tag = 'input window, operand 2, single buffered']
    #allocation8 [shape = 'u8[32768]{0}', space=vmem, size = 0x8000, scoped, tag = 'input window, operand 3, single buffered']
    #allocation9 [shape = 's32[1]{0}', space=sflag, size = 0x4, scoped, tag = 'scoped memory for tpu_custom_call.1']
    #allocation10 [shape = 'u8[32768]{0}', space=vmem, size = 0x8000, scoped, tag = 'output window, operand 0, single buffered']
    %9 = vsyncpa [#allocation3], 0
    %10 = vsyncpa [#allocation6], 0
    %11 = vsyncpa [#allocation9], 0
    %12 = vsyncpa [#allocation4], 0
    // Predicated region
    $region2: #{tpu_custom_call.1} parent=1 // pred_check
      _
    $region3: #{tpu_custom_call.1} parent=1 // pred_check_branch
      %14 = sbr.rel (0) target = $region5
    $region4: #{tpu_custom_call.1} parent=1 // pred_region
      %s16 = ssub.s32 1024, 1024
      %17 = vsyncadd [#allocation3], %s16
      %s18 = sshll.u32 [#allocation2], 4
      %s19 = int_to_ptr.vmem [resolvable:$true] %s18
      %24 = dma.hbm_to_vmem [thread:$0]  %s0, 1024, %s19, [#allocation3], 256, 256, 16
    $region5: #{tpu_custom_call.1} parent=1 // pred_fallthru
      _
    // Predicated region
    $region6: #{tpu_custom_call.1} parent=1 // pred_check
      _
    $region7: #{tpu_custom_call.1} parent=1 // pred_check_branch
      %26 = sbr.rel (0) target = $region9
    $region8: #{tpu_custom_call.1} parent=1 // pred_region
      %s28 = ssub.s32 4096, 4096
      %29 = vsyncadd [#allocation6], %s28
      %s30 = sshll.u32 [#allocation5], 4
      %s31 = int_to_ptr.vmem [resolvable:$true] %s30
      %36 = dma.hbm_to_vmem [thread:$0]  %s1, 4096, %s31, [#allocation6], 128, 128, 8
    $region9: #{tpu_custom_call.1} parent=1 // pred_fallthru
      _
    // Predicated region
    $region10: #{tpu_custom_call.1} parent=1 // pred_check
      _
    $region11: #{tpu_custom_call.1} parent=1 // pred_check_branch
      %38 = sbr.rel (0) target = $region13
    $region12: #{tpu_custom_call.1} parent=1 // pred_region
      %s40 = ssub.s32 1024, 1024
      %41 = vsyncadd [#allocation6], %s40
      %s42 = sshll.u32 [#allocation7], 4
      %s43 = int_to_ptr.vmem [resolvable:$true] %s42
      %48 = dma.hbm_to_vmem [thread:$0]  %s2, 1024, %s43, [#allocation6], 256, 256, 16
    $region13: #{tpu_custom_call.1} parent=1 // pred_fallthru
      _
    // Predicated region
    $region14: #{tpu_custom_call.1} parent=1 // pred_check
      _
    $region15: #{tpu_custom_call.1} parent=1 // pred_check_branch
      %50 = sbr.rel (0) target = $region17
    $region16: #{tpu_custom_call.1} parent=1 // pred_region
      %s52 = ssub.s32 1024, 1024
      %53 = vsyncadd [#allocation9], %s52
      %s54 = sshll.u32 [#allocation8], 4
      %s55 = int_to_ptr.vmem [resolvable:$true] %s54
      %60 = dma.hbm_to_vmem [thread:$0]  %s3, 1024, %s55, [#allocation9], 256, 256, 16
    $region17: #{tpu_custom_call.1} parent=1 // pred_fallthru
      _
    // Predicated region
    $region18: #{tpu_custom_call.1} parent=1 // pred_check
      _
    $region19: #{tpu_custom_call.1} parent=1 // pred_check_branch
      %62 = sbr.rel (0) target = $region21
    $region20: #{tpu_custom_call.1} parent=1 // pred_region
      %63 = dma.done [#allocation3], 1024
    $region21: #{tpu_custom_call.1} parent=1 // pred_fallthru
      _
    // Predicated region
    $region22: #{tpu_custom_call.1} parent=1 // pred_check
      _
    $region23: #{tpu_custom_call.1} parent=1 // pred_check_branch
      %65 = sbr.rel (0) target = $region25
    $region24: #{tpu_custom_call.1} parent=1 // pred_region
      %66 = dma.done [#allocation6], 4096
    $region25: #{tpu_custom_call.1} parent=1 // pred_fallthru
      _
    // Predicated region
    $region26: #{tpu_custom_call.1} parent=1 // pred_check
      _
    $region27: #{tpu_custom_call.1} parent=1 // pred_check_branch
      %68 = sbr.rel (0) target = $region29
    $region28: #{tpu_custom_call.1} parent=1 // pred_region
      %69 = dma.done [#allocation6], 1024
    $region29: #{tpu_custom_call.1} parent=1 // pred_fallthru
      _
    // Predicated region
    $region30: #{tpu_custom_call.1} parent=1 // pred_check
      _
    $region31: #{tpu_custom_call.1} parent=1 // pred_check_branch
      %71 = sbr.rel (0) target = $region33
    $region32: #{tpu_custom_call.1} parent=1 // pred_region
      %72 = dma.done [#allocation9], 1024
    $region33: #{tpu_custom_call.1} parent=1 // pred_fallthru
      _
    %p73 = scmp.eq.s32.totalorder 0, 0
    // Predicated region
    $region34: #{tpu_custom_call.1} parent=1 // pred_check
      %p74 = pneg %p73
    $region35: #{tpu_custom_call.1} parent=1 // pred_check_branch
      %76 = sbr.rel (%p74) target = $region37
    $region36: #{tpu_custom_call.1} parent=1 // pred_region
      %77 = vst [vmem:[#allocation10] sm:$0xff] 0.0
      %78 = vst [vmem:[#allocation10 + $0x8] sm:$0xff] 0.0
      %79 = vst [vmem:[#allocation10 + $0x10] sm:$0xff] 0.0
      %80 = vst [vmem:[#allocation10 + $0x18] sm:$0xff] 0.0
      %81 = vst [vmem:[#allocation10 + $0x20] sm:$0xff] 0.0
      %82 = vst [vmem:[#allocation10 + $0x28] sm:$0xff] 0.0
      %83 = vst [vmem:[#allocation10 + $0x30] sm:$0xff] 0.0
      %84 = vst [vmem:[#allocation10 + $0x38] sm:$0xff] 0.0
    $region37: #{tpu_custom_call.1} parent=1 // pred_fallthru
      _
    %v85 = vld [vmem:[#allocation2] sm:$0xff]
    %v86 = vld [vmem:[#allocation2 + $0x8] sm:$0xff]
    %v87 = vld [vmem:[#allocation2 + $0x10] sm:$0xff]
    %v88 = vld [vmem:[#allocation2 + $0x18] sm:$0xff]
    %v89 = vld [vmem:[#allocation2 + $0x20] sm:$0xff]
    %v90 = vld [vmem:[#allocation2 + $0x28] sm:$0xff]
    %v91 = vld [vmem:[#allocation2 + $0x30] sm:$0xff]
    %v92 = vld [vmem:[#allocation2 + $0x38] sm:$0xff]
    %v93 = vld [vmem:[#allocation7] sm:$0xff]
    %v94 = vld [vmem:[#allocation7 + $0x8] sm:$0xff]
    %v95 = vld [vmem:[#allocation7 + $0x10] sm:$0xff]
    %v96 = vld [vmem:[#allocation7 + $0x18] sm:$0xff]
    %v97 = vld [vmem:[#allocation7 + $0x20] sm:$0xff]
    %v98 = vld [vmem:[#allocation7 + $0x28] sm:$0xff]
    %v99 = vld [vmem:[#allocation7 + $0x30] sm:$0xff]
    %v100 = vld [vmem:[#allocation7 + $0x38] sm:$0xff]
    %v101 = vmul.f32 %v85, %v93
    %v102 = vmul.f32 %v86, %v94
    %v103 = vmul.f32 %v87, %v95
    %v104 = vmul.f32 %v88, %v96
    %v105 = vmul.f32 %v89, %v97
    %v106 = vmul.f32 %v90, %v98
    %v107 = vmul.f32 %v91, %v99
    %v108 = vmul.f32 %v92, %v100
    %v109 = vpack.c.bf16 %v103, %v101
    %v110 = vpack.c.bf16 %v104, %v102
    %v111 = vpack.c.bf16 %v107, %v105
    %v112 = vpack.c.bf16 %v108, %v106
    %v113 = vld [vmem:[#allocation10] sm:$0xff]
    %v114 = vld [vmem:[#allocation10 + $0x8] sm:$0xff]
    %v115 = vld [vmem:[#allocation10 + $0x10] sm:$0xff]
    %v116 = vld [vmem:[#allocation10 + $0x18] sm:$0xff]
    %v117 = vld [vmem:[#allocation10 + $0x20] sm:$0xff]
    %v118 = vld [vmem:[#allocation10 + $0x28] sm:$0xff]
    %v119 = vld [vmem:[#allocation10 + $0x30] sm:$0xff]
    %v120 = vld [vmem:[#allocation10 + $0x38] sm:$0xff]
    %v121 = vld [vmem:[#allocation5] sm:$0xff]
    %v122 = vld [vmem:[#allocation5 + $0x8] sm:$0xff]
    %v123 = vld [vmem:[#allocation5 + $0x10] sm:$0xff]
    %v124 = vld [vmem:[#allocation5 + $0x18] sm:$0xff]
    %v125 = vld [vmem:[#allocation5 + $0x20] sm:$0xff]
    %v126 = vld [vmem:[#allocation5 + $0x28] sm:$0xff]
    %v127 = vld [vmem:[#allocation5 + $0x30] sm:$0xff]
    %v128 = vld [vmem:[#allocation5 + $0x38] sm:$0xff]
    %v129 = vld [vmem:[#allocation5 + $0x40] sm:$0xff]
    %v130 = vld [vmem:[#allocation5 + $0x48] sm:$0xff]
    %v131 = vld [vmem:[#allocation5 + $0x50] sm:$0xff]
    %v132 = vld [vmem:[#allocation5 + $0x58] sm:$0xff]
    %v133 = vld [vmem:[#allocation5 + $0x60] sm:$0xff]
    %v134 = vld [vmem:[#allocation5 + $0x68] sm:$0xff]
    %v135 = vld [vmem:[#allocation5 + $0x70] sm:$0xff]
    %v136 = vld [vmem:[#allocation5 + $0x78] sm:$0xff]
    %v137 = vld [vmem:[#allocation5 + $0x80] sm:$0xff]
    %v138 = vld [vmem:[#allocation5 + $0x88] sm:$0xff]
    %v139 = vld [vmem:[#allocation5 + $0x90] sm:$0xff]
    %v140 = vld [vmem:[#allocation5 + $0x98] sm:$0xff]
    %v141 = vld [vmem:[#allocation5 + $0xa0] sm:$0xff]
    %v142 = vld [vmem:[#allocation5 + $0xa8] sm:$0xff]
    %v143 = vld [vmem:[#allocation5 + $0xb0] sm:$0xff]
    %v144 = vld [vmem:[#allocation5 + $0xb8] sm:$0xff]
    %v145 = vld [vmem:[#allocation5 + $0xc0] sm:$0xff]
    %v146 = vld [vmem:[#allocation5 + $0xc8] sm:$0xff]
    %v147 = vld [vmem:[#allocation5 + $0xd0] sm:$0xff]
    %v148 = vld [vmem:[#allocation5 + $0xd8] sm:$0xff]
    %v149 = vld [vmem:[#allocation5 + $0xe0] sm:$0xff]
    %v150 = vld [vmem:[#allocation5 + $0xe8] sm:$0xff]
    %v151 = vld [vmem:[#allocation5 + $0xf0] sm:$0xff]
    %v152 = vld [vmem:[#allocation5 + $0xf8] sm:$0xff]
    %v185 = vunpack.c.l.b16 %v121
    %v186 = vunpack.c.h.b16 %v121
    %v187 = vunpack.c.l.b16 %v122
    %v188 = vunpack.c.h.b16 %v122
    %v189 = vunpack.c.l.b16 %v123
    %v190 = vunpack.c.h.b16 %v123
    %v191 = vunpack.c.l.b16 %v124
    %v192 = vunpack.c.h.b16 %v124
    %v193 = vunpack.c.l.b16 %v125
    %v194 = vunpack.c.h.b16 %v125
    %v195 = vunpack.c.l.b16 %v126
    %v196 = vunpack.c.h.b16 %v126
    %v197 = vunpack.c.l.b16 %v127
    %v198 = vunpack.c.h.b16 %v127
    %v199 = vunpack.c.l.b16 %v128
    %v200 = vunpack.c.h.b16 %v128
    %v201 = vunpack.c.l.b16 %v129
    %v202 = vunpack.c.h.b16 %v129
    %v203 = vunpack.c.l.b16 %v130
    %v204 = vunpack.c.h.b16 %v130
    %v205 = vunpack.c.l.b16 %v131
    %v206 = vunpack.c.h.b16 %v131
    %v207 = vunpack.c.l.b16 %v132
    %v208 = vunpack.c.h.b16 %v132
    %v209 = vunpack.c.l.b16 %v133
    %v210 = vunpack.c.h.b16 %v133
    %v211 = vunpack.c.l.b16 %v134
    %v212 = vunpack.c.h.b16 %v134
    %v213 = vunpack.c.l.b16 %v135
    %v214 = vunpack.c.h.b16 %v135
    %v215 = vunpack.c.l.b16 %v136
    %v216 = vunpack.c.h.b16 %v136
    %v217 = vunpack.c.l.b16 %v137
    %v218 = vunpack.c.h.b16 %v137
    %v219 = vunpack.c.l.b16 %v138
    %v220 = vunpack.c.h.b16 %v138
    %v221 = vunpack.c.l.b16 %v139
    %v222 = vunpack.c.h.b16 %v139
    %v223 = vunpack.c.l.b16 %v140
    %v224 = vunpack.c.h.b16 %v140
    %v225 = vunpack.c.l.b16 %v141
    %v226 = vunpack.c.h.b16 %v141
    %v227 = vunpack.c.l.b16 %v142
    %v228 = vunpack.c.h.b16 %v142
    %v229 = vunpack.c.l.b16 %v143
    %v230 = vunpack.c.h.b16 %v143
    %v231 = vunpack.c.l.b16 %v144
    %v232 = vunpack.c.h.b16 %v144
    %v233 = vunpack.c.l.b16 %v145
    %v234 = vunpack.c.h.b16 %v145
    %v235 = vunpack.c.l.b16 %v146
    %v236 = vunpack.c.h.b16 %v146
    %v237 = vunpack.c.l.b16 %v147
    %v238 = vunpack.c.h.b16 %v147
    %v239 = vunpack.c.l.b16 %v148
    %v240 = vunpack.c.h.b16 %v148
    %v241 = vunpack.c.l.b16 %v149
    %v242 = vunpack.c.h.b16 %v149
    %v243 = vunpack.c.l.b16 %v150
    %v244 = vunpack.c.h.b16 %v150
    %v245 = vunpack.c.l.b16 %v151
    %v246 = vunpack.c.h.b16 %v151
    %v247 = vunpack.c.l.b16 %v152
    %v248 = vunpack.c.h.b16 %v152
    %v249 = vpack.c.b16 %v187, %v185
    %v250 = vpack.c.b16 %v188, %v186
    %v251 = vpack.c.b16 %v191, %v189
    %v252 = vpack.c.b16 %v192, %v190
    %v253 = vpack.c.b16 %v195, %v193
    %v254 = vpack.c.b16 %v196, %v194
    %v255 = vpack.c.b16 %v199, %v197
    %v256 = vpack.c.b16 %v200, %v198
    %v257 = vpack.c.b16 %v203, %v201
    %v258 = vpack.c.b16 %v204, %v202
    %v259 = vpack.c.b16 %v207, %v205
    %v260 = vpack.c.b16 %v208, %v206
    %v261 = vpack.c.b16 %v211, %v209
    %v262 = vpack.c.b16 %v212, %v210
    %v263 = vpack.c.b16 %v215, %v213
    %v264 = vpack.c.b16 %v216, %v214
    %v265 = vpack.c.b16 %v219, %v217
    %v266 = vpack.c.b16 %v220, %v218
    %v267 = vpack.c.b16 %v223, %v221
    %v268 = vpack.c.b16 %v224, %v222
    %v269 = vpack.c.b16 %v227, %v225
    %v270 = vpack.c.b16 %v228, %v226
    %v271 = vpack.c.b16 %v231, %v229
    %v272 = vpack.c.b16 %v232, %v230
    %v273 = vpack.c.b16 %v235, %v233
    %v274 = vpack.c.b16 %v236, %v234
    %v275 = vpack.c.b16 %v239, %v237
    %v276 = vpack.c.b16 %v240, %v238
    %v277 = vpack.c.b16 %v243, %v241
    %v278 = vpack.c.b16 %v244, %v242
    %v279 = vpack.c.b16 %v247, %v245
    %v280 = vpack.c.b16 %v248, %v246
    %313 = vmatprep.subr.bf16.mxu0 %v250
    %314 = vmatpush1.bf16.xpose.msra.mxu0 %v249
    %315 = vmatprep.subr.bf16.mxu0 %v252
    %316 = vmatpush1.bf16.xpose.msra.mxu0 %v251
    %317 = vmatprep.subr.bf16.mxu0 %v254
    %318 = vmatpush1.bf16.xpose.msra.mxu0 %v253
    %319 = vmatprep.subr.bf16.mxu0 %v256
    %320 = vmatpush1.bf16.xpose.msra.mxu0 %v255
    %321 = vmatprep.subr.bf16.mxu0 %v258
    %322 = vmatpush1.bf16.xpose.msra.mxu0 %v257
    %323 = vmatprep.subr.bf16.mxu0 %v260
    %324 = vmatpush1.bf16.xpose.msra.mxu0 %v259
    %325 = vmatprep.subr.bf16.mxu0 %v262
    %326 = vmatpush1.bf16.xpose.msra.mxu0 %v261
    %327 = vmatprep.subr.bf16.mxu0 %v264
    %328 = vmatpush1.bf16.xpose.msra.mxu0 %v263
    %329 = vmatprep.subr.bf16.mxu0 %v266
    %330 = vmatpush1.bf16.xpose.msra.mxu0 %v265
    %331 = vmatprep.subr.bf16.mxu0 %v268
    %332 = vmatpush1.bf16.xpose.msra.mxu0 %v267
    %333 = vmatprep.subr.bf16.mxu0 %v270
    %334 = vmatpush1.bf16.xpose.msra.mxu0 %v269
    %335 = vmatprep.subr.bf16.mxu0 %v272
    %336 = vmatpush1.bf16.xpose.msra.mxu0 %v271
    %337 = vmatprep.subr.bf16.mxu0 %v274
    %338 = vmatpush1.bf16.xpose.msra.mxu0 %v273
    %339 = vmatprep.subr.bf16.mxu0 %v276
    %340 = vmatpush1.bf16.xpose.msra.mxu0 %v275
    %341 = vmatprep.subr.bf16.mxu0 %v278
    %342 = vmatpush1.bf16.xpose.msra.mxu0 %v277
    %343 = vmatprep.subr.bf16.mxu0 %v280
    %344 = vmatpush1.bf16.xpose.msra.mxu0 %v279
    %345 = vmatprep.mubr.bf16.mxu0 %v110
    %346 = vmatmul.mubr.bf16.gmra.mrb[0].mxu0 %v109
    %v347 = vpop.f32.mrb[0].mxu0
    %v348 = vadd.f32 0.0, %v347
    %v349 = vpop.f32.mrb[0].mxu0
    %v350 = vadd.f32 0.0, %v349
    %v351 = vpop.f32.mrb[0].mxu0
    %v352 = vadd.f32 0.0, %v351
    %v353 = vpop.f32.mrb[0].mxu0
    %v354 = vadd.f32 0.0, %v353
    %355 = vmatprep.mubr.bf16.mxu0 %v112
    %356 = vmatmul.mubr.bf16.gmra.mrb[0].mxu0 %v111
    %v357 = vpop.f32.mrb[0].mxu0
    %v358 = vadd.f32 0.0, %v357
    %v359 = vpop.f32.mrb[0].mxu0
    %v360 = vadd.f32 0.0, %v359
    %v361 = vpop.f32.mrb[0].mxu0
    %v362 = vadd.f32 0.0, %v361
    %v363 = vpop.f32.mrb[0].mxu0
    %v364 = vadd.f32 0.0, %v363
    %365 = vdwg.mxu0
    %v366 = vadd.f32 %v113, %v348
    %v367 = vadd.f32 %v114, %v350
    %v368 = vadd.f32 %v115, %v352
    %v369 = vadd.f32 %v116, %v354
    %v370 = vadd.f32 %v117, %v358
    %v371 = vadd.f32 %v118, %v360
    %v372 = vadd.f32 %v119, %v362
    %v373 = vadd.f32 %v120, %v364
    %374 = vst [vmem:[#allocation10] sm:$0xff] %v366
    %375 = vst [vmem:[#allocation10 + $0x8] sm:$0xff] %v367
    %376 = vst [vmem:[#allocation10 + $0x10] sm:$0xff] %v368
    %377 = vst [vmem:[#allocation10 + $0x18] sm:$0xff] %v369
    %378 = vst [vmem:[#allocation10 + $0x20] sm:$0xff] %v370
    %379 = vst [vmem:[#allocation10 + $0x28] sm:$0xff] %v371
    %380 = vst [vmem:[#allocation10 + $0x30] sm:$0xff] %v372
    %381 = vst [vmem:[#allocation10 + $0x38] sm:$0xff] %v373
    // Predicated region
    $region38: #{tpu_custom_call.1} parent=1 // pred_check
      %p382 = pneg %p73
    $region39: #{tpu_custom_call.1} parent=1 // pred_check_branch
      %384 = sbr.rel (%p382) target = $region41
    $region40: #{tpu_custom_call.1} parent=1 // pred_region
      %v385 = vld [vmem:[#allocation10] sm:$0xff]
      %v386 = vld [vmem:[#allocation10 + $0x8] sm:$0xff]
      %v387 = vld [vmem:[#allocation10 + $0x10] sm:$0xff]
      %v388 = vld [vmem:[#allocation10 + $0x18] sm:$0xff]
      %v389 = vld [vmem:[#allocation10 + $0x20] sm:$0xff]
      %v390 = vld [vmem:[#allocation10 + $0x28] sm:$0xff]
      %v391 = vld [vmem:[#allocation10 + $0x30] sm:$0xff]
      %v392 = vld [vmem:[#allocation10 + $0x38] sm:$0xff]
      %v393 = vld [vmem:[#allocation8] sm:$0xff]
      %v394 = vld [vmem:[#allocation8 + $0x8] sm:$0xff]
      %v395 = vld [vmem:[#allocation8 + $0x10] sm:$0xff]
      %v396 = vld [vmem:[#allocation8 + $0x18] sm:$0xff]
      %v397 = vld [vmem:[#allocation8 + $0x20] sm:$0xff]
      %v398 = vld [vmem:[#allocation8 + $0x28] sm:$0xff]
      %v399 = vld [vmem:[#allocation8 + $0x30] sm:$0xff]
      %v400 = vld [vmem:[#allocation8 + $0x38] sm:$0xff]
      %v401 = vmul.f32 %v385, %v393
      %v402 = vmul.f32 %v386, %v394
      %v403 = vmul.f32 %v387, %v395
      %v404 = vmul.f32 %v388, %v396
      %v405 = vmul.f32 %v389, %v397
      %v406 = vmul.f32 %v390, %v398
      %v407 = vmul.f32 %v391, %v399
      %v408 = vmul.f32 %v392, %v400
      %409 = vst [vmem:[#allocation10] sm:$0xff] %v401
      %410 = vst [vmem:[#allocation10 + $0x8] sm:$0xff] %v402
      %411 = vst [vmem:[#allocation10 + $0x10] sm:$0xff] %v403
      %412 = vst [vmem:[#allocation10 + $0x18] sm:$0xff] %v404
      %413 = vst [vmem:[#allocation10 + $0x20] sm:$0xff] %v405
      %414 = vst [vmem:[#allocation10 + $0x28] sm:$0xff] %v406
      %415 = vst [vmem:[#allocation10 + $0x30] sm:$0xff] %v407
      %416 = vst [vmem:[#allocation10 + $0x38] sm:$0xff] %v408
    $region41: #{tpu_custom_call.1} parent=1 // pred_fallthru
      _
    // Predicated region
    $region42: #{tpu_custom_call.1} parent=1 // pred_check
      _
    $region43: #{tpu_custom_call.1} parent=1 // pred_check_branch
      %418 = sbr.rel (0) target = $region45
    $region44: #{tpu_custom_call.1} parent=1 // pred_region
      %s420 = ssub.s32 1024, 1024
      %421 = vsyncadd [#allocation4], %s420
      %s422 = sshll.u32 [#allocation10], 4
      %s423 = int_to_ptr.vmem [resolvable:$true] %s422
      %428 = dma.vmem_to_hbm [thread:$0]  %s423, 1024, %s4, [#allocation4], 256, 256, 16
    $region45: #{tpu_custom_call.1} parent=1 // pred_fallthru
      _
    // Predicated region
    $region46: #{tpu_custom_call.1} parent=1 // pred_check
      _
    $region47: #{tpu_custom_call.1} parent=1 // pred_check_branch
      %430 = sbr.rel (0) target = $region49
    $region48: #{tpu_custom_call.1} parent=1 // pred_region
      %431 = dma.done [#allocation4], 1024
    $region49: #{tpu_custom_call.1} parent=1 // pred_fallthru
      _
    %432 = vsyncpa [#allocation3], 1
    %433 = vsyncpa [#allocation6], 1
    %434 = vsyncpa [#allocation9], 1
    %435 = vsyncpa [#allocation4], 1

</llo_original>
